<compile_context>
chip_gen: v6e
topology: v6e:2x2x1
jax: 0.10.0
libtpu: 0.0.40
codegen_flags: <defaults>
</compile_context>

<pallas_src>
import functools

import numpy as np
import jax
import jax.numpy as jnp
from jax.experimental import pallas as pl
from jax.experimental.pallas import tpu as pltpu


_MAX_BLOCK_BYTES = 2 * 1024 * 1024   # per-block cap; x4 live buffers stays well inside VMEM
_MAX_LANE_BLOCK = 2048               # lane tile (multiple of 128) when the time axis is tiled


def _choose_blocks(B, F, T, itemsize):
    """Pick (batch_block, time_block) so blocks are lane-dense and VMEM-bounded."""
    row_bytes = F * itemsize
    if F * T * itemsize <= _MAX_BLOCK_BYTES:
        bt = T                                                   # full time axis in one block
    else:
        lane_budget = max(128, (_MAX_BLOCK_BYTES // row_bytes) // 128 * 128)
        bt = min(_MAX_LANE_BLOCK, lane_budget)                   # 128-multiple -> full vst
    bb = max(1, min(B, _MAX_BLOCK_BYTES // (row_bytes * bt)))
    return bb, bt


def _specaug_kernel(params_ref, x_ref, o_ref, *, bt):
    """Zero a frequency band and a time band of one spectrogram block.

    params_ref : SMEM int32[4] = [f_start, f_end, t_start, t_end]
    x_ref/o_ref: VMEM (bb, F, bt) blocks. The freq axis is never tiled, so the
    sublane iota is already the global frequency bin; the time axis is tiled,
    so add the block's global time offset (program_id(1) * bt).
    """
    f_start = params_ref[0]
    f_end = params_ref[1]
    t_start = params_ref[2]
    t_end = params_ref[3]

    t0 = pl.program_id(1) * bt                       # global time offset of this block

    x = x_ref[...]                                   # (bb, F, bt)
    f_idx = jax.lax.broadcasted_iota(jnp.int32, x.shape, 1)
    t_idx = t0 + jax.lax.broadcasted_iota(jnp.int32, x.shape, 2)

    mask = ((f_idx >= f_start) & (f_idx < f_end)) | \
           ((t_idx >= t_start) & (t_idx < t_end))
    # Scalar 0.0 (not zeros_like): no full-tile broadcast materialized.
    o_ref[...] = jnp.where(mask, 0.0, x).astype(o_ref.dtype)


@jax.jit
def _specaug_pallas(x, params):
    B, F, T = x.shape
    bb, bt = _choose_blocks(B, F, T, x.dtype.itemsize)
    grid = (pl.cdiv(B, bb), pl.cdiv(T, bt))
    kernel = functools.partial(_specaug_kernel, bt=bt)
    return pl.pallas_call(
        kernel,
        out_shape=jax.ShapeDtypeStruct((B, F, T), x.dtype),
        grid_spec=pltpu.PrefetchScalarGridSpec(
            num_scalar_prefetch=1,          # params -> SMEM, passed first to kernel
            grid=grid,
            in_specs=[pl.BlockSpec((bb, F, bt), lambda b, t, p: (b, 0, t))],
            out_specs=pl.BlockSpec((bb, F, bt), lambda b, t, p: (b, 0, t)),
        ),
        compiler_params=pltpu.CompilerParams(
            dimension_semantics=("parallel", "parallel"),
        ),
    )(params, x)


class SpecAugment:
    """JAX/Pallas port of deepspeech_pytorch SpecAugment.

    Gating and mask-parameter draws happen on the host (numpy RandomState),
    so __call__ performs no device->host synchronization before launching
    the masking kernel.
    """

    def __init__(self, rate, freq_mask=15, time_mask=0.1):
        self.rng = np.random.RandomState(42)
        self.freq_mask = freq_mask
        self.time_mask = time_mask
        self.rate = rate

    def __call__(self, x):
        probability = float(self.rng.rand())          # host RNG -> no device sync
        if self.rate > probability:
            return self.specaug(x)
        return x

    def specaug(self, x):
        B, F, T = x.shape

        # FrequencyMasking (mask_param = freq_mask)
        f_value = self.rng.rand() * self.freq_mask
        f_min = self.rng.rand() * (F - f_value)
        f_start, f_end = int(f_min), int(f_min + f_value)

        # TimeMasking (mask_param = x.shape[2] * time_mask)
        t_param = T * self.time_mask
        t_value = self.rng.rand() * t_param
        t_min = self.rng.rand() * (T - t_value)
        t_start, t_end = int(t_min), int(t_min + t_value)

        params = jnp.asarray([f_start, f_end, t_start, t_end], dtype=jnp.int32)
        return _specaug_pallas(x, params)


def _reference(x, params):
    """Pure-JAX reference for correctness check."""
    f_start, f_end, t_start, t_end = [int(v) for v in np.asarray(params)]
    B, F, T = x.shape
    f_idx = jnp.arange(F)[None, :, None]
    t_idx = jnp.arange(T)[None, None, :]
    mask = ((f_idx >= f_start) & (f_idx < f_end)) | ((t_idx >= t_start) & (t_idx < t_end))
    return jnp.where(mask, 0.0, x)


if __name__ == "__main__":
    key = jax.random.PRNGKey(0)

    # Small spectrogram: (batch, freq_bins, time_frames).
    B, F, T = 2, 16, 32
    x = jax.random.normal(key, (B, F, T), dtype=jnp.float32)

    aug = SpecAugment(rate=1.0, freq_mask=15, time_mask=0.1)
    out = jax.block_until_ready(aug(x))
    assert out.shape == x.shape and out.dtype == x.dtype

    # Cross-check the kernel against the pure-JAX reference (fixed params).
    params = jnp.asarray([3, 9, 5, 8], dtype=jnp.int32)
    got = jax.block_until_ready(_specaug_pallas(x, params))
    want = _reference(x, params)
    assert jnp.allclose(got, want), "kernel mismatch vs reference (small)"

    # Second shape that exercises lane tiling + a ragged final time block.
    B2, F2, T2 = 2, 160, 4000
    x2 = jax.random.normal(jax.random.PRNGKey(1), (B2, F2, T2), dtype=jnp.float32)
    params2 = jnp.asarray([7, 19, 513, 897], dtype=jnp.int32)
    got2 = jax.block_until_ready(_specaug_pallas(x2, params2))
    want2 = _reference(x2, params2)
    assert jnp.allclose(got2, want2), "kernel mismatch vs reference (tiled)"

    print("KERNEL_OK")
</pallas_src>

<mosaic_0001>
module attributes {stable_mosaic.version = 11 : i64} {
  func.func @_specaug_kernel(%arg0: i32, %arg1: i32, %arg2: memref<4xi32, #tpu.memory_space<smem>>, %arg3: memref<2x16x32xf32, #tpu.memory_space<vmem>>, %arg4: memref<2x16x32xf32, #tpu.memory_space<vmem>>) attributes {dimension_semantics = [#tpu.dimension_semantics<parallel>, #tpu.dimension_semantics<parallel>], iteration_bounds = array<i64: 1, 1>, scalar_prefetch = 1 : i64, scratch_operands = 0 : i64, tpu.core_type = #tpu.core_type<tc>, window_params = [{transform_indices = @transform_0, window_bounds = array<i64: 2, 16, 32>}, {transform_indices = @transform_1, window_bounds = array<i64: 2, 16, 32>}]} {
    %c0 = arith.constant 0 : index
    %0 = memref.load %arg2[%c0] : memref<4xi32, #tpu.memory_space<smem>>
    %c1 = arith.constant 1 : index
    %1 = memref.load %arg2[%c1] : memref<4xi32, #tpu.memory_space<smem>>
    %c2 = arith.constant 2 : index
    %2 = memref.load %arg2[%c2] : memref<4xi32, #tpu.memory_space<smem>>
    %c3 = arith.constant 3 : index
    %3 = memref.load %arg2[%c3] : memref<4xi32, #tpu.memory_space<smem>>
    %c32_i32 = arith.constant 32 : i32
    %4 = arith.muli %arg1, %c32_i32 : i32
    %c0_0 = arith.constant 0 : index
    %c0_1 = arith.constant 0 : index
    %c0_2 = arith.constant 0 : index
    %5 = vector.load %arg3[%c0_0, %c0_1, %c0_2] : memref<2x16x32xf32, #tpu.memory_space<vmem>>, vector<2x16x32xf32>
    %6 = tpu.iota {dimensions = array<i32: 1>} : vector<2x16x32xi32>
    %7 = tpu.iota {dimensions = array<i32: 2>} : vector<2x16x32xi32>
    %8 = vector.broadcast %4 : i32 to vector<2x16x32xi32>
    %9 = arith.addi %8, %7 : vector<2x16x32xi32>
    %10 = vector.broadcast %0 : i32 to vector<2x16x32xi32>
    %11 = arith.cmpi sge, %6, %10 : vector<2x16x32xi32>
    %12 = vector.broadcast %1 : i32 to vector<2x16x32xi32>
    %13 = arith.cmpi slt, %6, %12 : vector<2x16x32xi32>
    %14 = arith.andi %11, %13 : vector<2x16x32xi1>
    %15 = vector.broadcast %2 : i32 to vector<2x16x32xi32>
    %16 = arith.cmpi sge, %9, %15 : vector<2x16x32xi32>
    %17 = vector.broadcast %3 : i32 to vector<2x16x32xi32>
    %18 = arith.cmpi slt, %9, %17 : vector<2x16x32xi32>
    %19 = arith.andi %16, %18 : vector<2x16x32xi1>
    %20 = arith.ori %14, %19 : vector<2x16x32xi1>
    %cst = arith.constant 0.000000e+00 : f32
    %21 = vector.broadcast %cst : f32 to vector<2x16x32xf32>
    %22 = arith.select %20, %21, %5 : vector<2x16x32xi1>, vector<2x16x32xf32>
    %c0_3 = arith.constant 0 : index
    %c0_4 = arith.constant 0 : index
    %c0_5 = arith.constant 0 : index
    %23 = vector.load %arg4[%c0_3, %c0_4, %c0_5] : memref<2x16x32xf32, #tpu.memory_space<vmem>>, vector<2x16x32xf32>
    tpu.vector_store %arg4[%c0_3, %c0_4, %c0_5], %22 {strides = array<i32>} : memref<2x16x32xf32, #tpu.memory_space<vmem>>, vector<2x16x32xf32>,
    return
  }
  func.func @transform_0(%arg0: i32, %arg1: i32, %arg2: memref<4xi32, #tpu.memory_space<smem>>) -> (i32, i32, i32) {
    %c0_i32 = arith.constant 0 : i32
    %c0_i32_0 = arith.constant 0 : i32
    return %arg0, %c0_i32, %arg1 : i32, i32, i32
  }
  func.func @transform_1(%arg0: i32, %arg1: i32, %arg2: memref<4xi32, #tpu.memory_space<smem>>) -> (i32, i32, i32) {
    %c0_i32 = arith.constant 0 : i32
    %c0_i32_0 = arith.constant 0 : i32
    return %arg0, %c0_i32, %arg1 : i32, i32, i32
  }
}

</mosaic_0001>

<llo_original>
// kernel: _specaug_pallas.1
$region0: #{_specaug_pallas.1}
  #allocation0 [shape = 'u32[]', space=smem, size = 0x4, offset = 0x4, fixed_abs, tag = 'smem constant byte address 0x4 - core index']
  #allocation1 [shape = 'u32[144,128]{1,0:T(1,128)}', space=vmem, size = 0x12000, scoped, tag = 'internal scratch']
  #allocation2 [shape = 's32[1]{0}', space=sflag, size = 0x4, scoped, tag = 'scoped memory for _specaug_pallas.1']
  #allocation3 [shape = 'u8[512]{0}', space=smem, size = 0x200, scoped, tag = 'prefetched SMEM operand 0']
  %s0 = inlined_call_operand.vmem [shape: s32[4], index: 0, kind: input, shape index: {}]
  %s1 = inlined_call_operand.hbm [shape: f32[2,16,32], index: 1, kind: input, shape index: {}]
  %s2 = inlined_call_operand.hbm [shape: f32[2,16,32], index: 2, kind: output, shape index: {}]
  %s3 = sld [smem:[#allocation0]]
  $region18: #{_specaug_pallas.1} parent=0
    _
  %s5 = ssub.s32 1, %s3
  %s6 = scalar_select 0, %s5, %s3
  %s7 = sshll.u32 %s0, 4
  %s8 = int_to_ptr.vmem [resolvable:$true] %s7
  %10 = dma.vmem_to_smem %s8, 16, [#allocation3], [#allocation2]
  %11 = dma.done [#allocation2], 16
  %12 = sfence
  $region1: #{_specaug_pallas.1} parent=0
    #allocation4 [shape = 'u8[16384]{0}', space=vmem, size = 0x4000, scoped, tag = 'input window, operand 1, single buffered']
    #allocation5 [shape = 's32[1]{0}', space=sflag, size = 0x4, scoped, tag = 'scoped memory for _specaug_pallas.1']
    #allocation6 [shape = 's32[1]{0}', space=sflag, size = 0x4, scoped, tag = 'scoped memory for _specaug_pallas.1']
    #allocation7 [shape = 'u8[16384]{0}', space=vmem, size = 0x4000, scoped, tag = 'output window, operand 0, single buffered']
    %13 = vsyncpa [#allocation5], 0
    %14 = vsyncpa [#allocation6], 0
    // Predicated region
    $region2: #{_specaug_pallas.1} parent=1 // pred_check
      _
    $region3: #{_specaug_pallas.1} parent=1 // pred_check_branch
      %16 = sbr.rel (0) target = $region5
    $region4: #{_specaug_pallas.1} parent=1 // pred_region
      %s18 = ssub.s32 512, 512
      %19 = vsyncadd [#allocation5], %s18
      %s20 = sshll.u32 [#allocation4], 4
      %s21 = int_to_ptr.vmem [resolvable:$true] %s20
      %26 = dma.hbm_to_vmem [thread:$0]  %s1, 512, %s21, [#allocation5], 128, 128, 8
    $region5: #{_specaug_pallas.1} parent=1 // pred_fallthru
      _
    // Predicated region
    $region6: #{_specaug_pallas.1} parent=1 // pred_check
      _
    $region7: #{_specaug_pallas.1} parent=1 // pred_check_branch
      %28 = sbr.rel (0) target = $region9
    $region8: #{_specaug_pallas.1} parent=1 // pred_region
      %29 = dma.done [#allocation5], 512
    $region9: #{_specaug_pallas.1} parent=1 // pred_fallthru
      _
    %s30 = sld [smem:[#allocation3]]
    %s31 = sld [smem:[#allocation3 + $0x1]]
    %s32 = sld [smem:[#allocation3 + $0x2]]
    %s33 = sld [smem:[#allocation3 + $0x3]]
    %s34 = smul.u32 0, 32
    %v35 = vld [vmem:[#allocation4] sm:$0xff]
    %v36 = vld [vmem:[#allocation4 + $0x8] sm:$0xff]
    %v37 = vld [vmem:[#allocation4 + $0x10] sm:$0xff]
    %v38 = vld [vmem:[#allocation4 + $0x18] sm:$0xff]
    %v39 = vlaneseq
    %v40 = vshrl.u32 %v39, 7
    %v41 = vadd.s32 %v40, 8
    %v42 = vlaneseq
    %v43 = vand.u32 %v42, 127
    %v44 = vstv %s34
    %v45 = vadd.s32 %v44, %v43
    %v46 = vstv %s30
    %vm47 = vcmp.ge.s32.totalorder %v40, %v46
    %vm48 = vcmp.ge.s32.totalorder %v41, %v46
    %v49 = vstv %s31
    %vm50 = vcmp.lt.s32.totalorder %v40, %v49
    %vm51 = vcmp.lt.s32.totalorder %v41, %v49
    %vm52 = vmand %vm47, %vm50
    %vm53 = vmand %vm48, %vm51
    %v54 = vstv %s32
    %vm55 = vcmp.ge.s32.totalorder %v45, %v54
    %v56 = vstv %s33
    %vm57 = vcmp.lt.s32.totalorder %v45, %v56
    %vm58 = vmand %vm55, %vm57
    %vm59 = vmor %vm52, %vm58
    %vm60 = vmor %vm53, %vm58
    %v61 = vsel %vm59, 0.0, %v35
    %v62 = vsel %vm60, 0.0, %v36
    %v63 = vsel %vm59, 0.0, %v37
    %v64 = vsel %vm60, 0.0, %v38
    %vm65 = vcmask 261120
    %66 = vst.msk [vmem:[#allocation7] sm:$0xff] %vm65, %v61
    %67 = vst.msk [vmem:[#allocation7 + $0x8] sm:$0xff] %vm65, %v62
    %68 = vst.msk [vmem:[#allocation7 + $0x10] sm:$0xff] %vm65, %v63
    %69 = vst.msk [vmem:[#allocation7 + $0x18] sm:$0xff] %vm65, %v64
    // Predicated region
    $region10: #{_specaug_pallas.1} parent=1 // pred_check
      _
    $region11: #{_specaug_pallas.1} parent=1 // pred_check_branch
      %71 = sbr.rel (0) target = $region13
    $region12: #{_specaug_pallas.1} parent=1 // pred_region
      %s73 = ssub.s32 512, 512
      %74 = vsyncadd [#allocation6], %s73
      %s75 = sshll.u32 [#allocation7], 4
      %s76 = int_to_ptr.vmem [resolvable:$true] %s75
      %81 = dma.vmem_to_hbm [thread:$0]  %s76, 512, %s2, [#allocation6], 128, 128, 8
    $region13: #{_specaug_pallas.1} parent=1 // pred_fallthru
      _
    // Predicated region
    $region14: #{_specaug_pallas.1} parent=1 // pred_check
      _
    $region15: #{_specaug_pallas.1} parent=1 // pred_check_branch
      %83 = sbr.rel (0) target = $region17
    $region16: #{_specaug_pallas.1} parent=1 // pred_region
      %84 = dma.done [#allocation6], 512
    $region17: #{_specaug_pallas.1} parent=1 // pred_fallthru
      _
    %85 = vsyncpa [#allocation5], 1
    %86 = vsyncpa [#allocation6], 1

</llo_original>
